<compile_context>
chip_gen: v6e
topology: v6e:2x2x1
jax: 0.10.0
libtpu: 0.0.40
codegen_flags: <defaults>
</compile_context>

<pallas_src>
import math

import jax
import jax.numpy as jnp
from jax.experimental import pallas as pl
from jax.experimental.pallas import tpu as pltpu

_MIN_LANES = 128
_MAX_LANES = 1024
_TILE_MIN_BYTES = 512 << 10      # amortize ~0.35 us per-grid-step overhead
_TILE_CAP_BYTES = 4 << 20        # in+out double-buffered => 4x = 16 MiB live VMEM
_VMEM_LIMIT_BYTES = 32 << 20     # safe on v5e/v6e (128 MiB) and v7x (64 MiB)
_MIN_PIPELINE_STEPS = 8          # >=4 needed for overlap + v7x dual-TC sharding


# ---------------------------------------------------------------------------
# Pallas kernel: copy one (block_rows, lanes) tile.
# ---------------------------------------------------------------------------
def _copy_kernel(x_ref, o_ref):
    o_ref[...] = x_ref[...]


def _round_up(a, b):
    return -(-a // b) * b


def _sublane_pack(itemsize):
    # packed sublane rows per vreg tile: f32/i32 -> 8, bf16/f16 -> 16, int8 -> 32
    return (4 // itemsize) * 8


def _choose_lanes(total):
    """Largest lane width in {1024,512,256,128} that divides total (else 128)."""
    lanes = _MAX_LANES
    while lanes > _MIN_LANES and total % lanes != 0:
        lanes //= 2
    return lanes


def _choose_block_rows(rows, lanes, itemsize, sub):
    """Block sized to ~1/8 of the data, clamped to [512 KiB, 4 MiB]."""
    row_bytes = lanes * itemsize
    total_bytes = rows * row_bytes
    target = min(_TILE_CAP_BYTES,
                 max(_TILE_MIN_BYTES, total_bytes // _MIN_PIPELINE_STEPS))
    block_rows = max(sub, (target // row_bytes) // sub * sub)
    # Never allocate a block much bigger than the whole (small) array.
    block_rows = min(block_rows, max(sub, _round_up(rows, sub)))
    return block_rows


def _pallas_copy_2d(x2d, block_rows):
    """Stream a (rows, lanes) slab through VMEM, tiled along rows."""
    rows, lanes = x2d.shape
    grid = (pl.cdiv(rows, block_rows),)      # partial edge block masked by Pallas
    return pl.pallas_call(
        _copy_kernel,
        out_shape=jax.ShapeDtypeStruct((rows, lanes), x2d.dtype),
        grid_spec=pltpu.PrefetchScalarGridSpec(
            num_scalar_prefetch=0,
            grid=grid,
            in_specs=[pl.BlockSpec((block_rows, lanes), lambda i: (i, 0))],
            out_specs=pl.BlockSpec((block_rows, lanes), lambda i: (i, 0)),
        ),
        compiler_params=pltpu.CompilerParams(
            dimension_semantics=("parallel",),   # shards rows across TCs on v7x
            vmem_limit_bytes=_VMEM_LIMIT_BYTES,
        ),
    )(x2d)


# ---------------------------------------------------------------------------
# View module equivalent
# ---------------------------------------------------------------------------
class View:
    """JAX/Pallas equivalent of the PyTorch `View` module.

    View(*sizes)(x) == torch.Tensor.view(x, *sizes)  (row-major reshape,
    supports a single -1 wildcard dimension).
    """

    def __init__(self, *args):
        if len(args) == 1 and isinstance(args[0], (tuple, list)):
            self.size = tuple(args[0])
        else:
            self.size = tuple(args)

    def _resolve_size(self, total):
        size = list(self.size)
        neg = [i for i, s in enumerate(size) if s == -1]
        if len(neg) > 1:
            raise ValueError("only one dimension can be inferred (-1)")
        if neg:
            known = math.prod(s for s in size if s != -1)
            if known == 0 or total % known != 0:
                raise ValueError(f"cannot view {total} elements as {self.size}")
            size[neg[0]] = total // known
        if math.prod(size) != total:
            raise ValueError(f"cannot view {total} elements as {self.size}")
        return tuple(size)

    def __call__(self, x):
        total = math.prod(x.shape) if x.shape else 1
        out_size = self._resolve_size(total)

        itemsize = jnp.dtype(x.dtype).itemsize
        # Metadata-only fallback for degenerate / unsupported-dtype cases.
        # TODO(synk): 64-bit and bool dtypes bypass the Pallas copy path.
        if total == 0 or itemsize not in (1, 2, 4) or x.dtype == jnp.bool_:
            return jnp.reshape(x, out_size)

        # C-order flatten (identical semantics to torch .view on contiguous input)
        x_flat = jnp.reshape(x, (total,))

        lanes = _choose_lanes(total)
        padded_total = _round_up(total, lanes)     # only the final <lanes elems
        if padded_total != total:
            x_flat = jnp.pad(x_flat, (0, padded_total - total))
        rows = padded_total // lanes

        sub = _sublane_pack(itemsize)
        block_rows = _choose_block_rows(rows, lanes, itemsize, sub)

        y2d = _pallas_copy_2d(x_flat.reshape(rows, lanes), block_rows)

        y_flat = jnp.reshape(y2d, (padded_total,))
        if padded_total != total:
            y_flat = y_flat[:total]
        return jnp.reshape(y_flat, out_size)


if __name__ == "__main__":
    key = jax.random.PRNGKey(0)

    # NCHW-shaped input, as a Conv2d-style feature map would be.
    x = jax.random.normal(key, (2, 4, 16, 16), dtype=jnp.float32)

    # flatten spatial dims: (2, 4, 16, 16) -> (2, 4, 256), with -1 wildcard
    view = View(2, 4, -1)
    y = jax.block_until_ready(jax.jit(view.__call__)(x))
    assert y.shape == (2, 4, 256), y.shape
    assert y.dtype == x.dtype
    assert bool(jnp.array_equal(y, jnp.reshape(x, (2, 4, 256))))

    # explicit full size through the same tiled path
    y2 = jax.block_until_ready(jax.jit(View((8, 256)).__call__)(x))
    assert y2.shape == (8, 256)
    assert bool(jnp.array_equal(y2, jnp.reshape(x, (8, 256))))

    # ragged total (not a multiple of 128) exercises the tail-pad path
    xr = jax.random.normal(jax.random.PRNGKey(0), (2, 3, 5, 7), dtype=jnp.float32)
    y3 = jax.block_until_ready(jax.jit(View(6, 35).__call__)(xr))
    assert y3.shape == (6, 35)
    assert bool(jnp.array_equal(y3, jnp.reshape(xr, (6, 35))))

    # larger slab: exercises the multi-step (pipelined) grid and partial blocks
    xl = jax.random.normal(jax.random.PRNGKey(0), (4, 64, 64, 32), dtype=jnp.float32)
    y4 = jax.block_until_ready(jax.jit(View(4, -1).__call__)(xl))
    assert y4.shape == (4, 64 * 64 * 32)
    assert bool(jnp.array_equal(y4, jnp.reshape(xl, (4, 64 * 64 * 32))))

    # bf16 path (packed sublane tile = 16 rows)
    xb = x.astype(jnp.bfloat16)
    y5 = jax.block_until_ready(jax.jit(View(-1).__call__)(xb))
    assert y5.shape == (2 * 4 * 16 * 16,)
    assert y5.dtype == jnp.bfloat16
    assert bool(jnp.array_equal(y5, jnp.reshape(xb, (-1,))))

    print("KERNEL_OK")
</pallas_src>

<mosaic_0001>
module attributes {stable_mosaic.version = 11 : i64} {
  func.func @_copy_kernel(%arg0: i32, %arg1: memref<8x1024xf32, #tpu.memory_space<vmem>>, %arg2: memref<8x1024xf32, #tpu.memory_space<vmem>>) attributes {dimension_semantics = [#tpu.dimension_semantics<parallel>], iteration_bounds = array<i64: 1>, scalar_prefetch = 0 : i64, scratch_operands = 0 : i64, tpu.core_type = #tpu.core_type<tc>, window_params = [{transform_indices = @transform_0, window_bounds = array<i64: 8, 1024>}, {transform_indices = @transform_1, window_bounds = array<i64: 8, 1024>}]} {
    %c0 = arith.constant 0 : index
    %c0_0 = arith.constant 0 : index
    %0 = vector.load %arg1[%c0, %c0_0] : memref<8x1024xf32, #tpu.memory_space<vmem>>, vector<8x1024xf32>
    %c0_1 = arith.constant 0 : index
    %c0_2 = arith.constant 0 : index
    %1 = vector.load %arg2[%c0_1, %c0_2] : memref<8x1024xf32, #tpu.memory_space<vmem>>, vector<8x1024xf32>
    tpu.vector_store %arg2[%c0_1, %c0_2], %0 {strides = array<i32>} : memref<8x1024xf32, #tpu.memory_space<vmem>>, vector<8x1024xf32>,
    return
  }
  func.func @transform_0(%arg0: i32) -> (i32, i32) {
    %c0_i32 = arith.constant 0 : i32
    %c0_i32_0 = arith.constant 0 : i32
    return %arg0, %c0_i32 : i32, i32
  }
  func.func @transform_1(%arg0: i32) -> (i32, i32) {
    %c0_i32 = arith.constant 0 : i32
    %c0_i32_0 = arith.constant 0 : i32
    return %arg0, %c0_i32 : i32, i32
  }
}

</mosaic_0001>

<llo_original>
// kernel: a_call__.1
$region0: #{a_call__.1}
  #allocation0 [shape = 'u32[]', space=smem, size = 0x4, offset = 0x4, fixed_abs, tag = 'smem constant byte address 0x4 - core index']
  #allocation1 [shape = 'u32[144,128]{1,0:T(1,128)}', space=vmem, size = 0x12000, scoped, tag = 'internal scratch']
  %s0 = inlined_call_operand.vmem [shape: f32[2,1024], index: 0, kind: input, shape index: {}]
  %s1 = inlined_call_operand.vmem [shape: f32[2,1024], index: 1, kind: output, shape index: {}]
  %s2 = sld [smem:[#allocation0]]
  $region33: #{a_call__.1} parent=0
    _
  %s4 = ssub.s32 1, %s2
  %s5 = scalar_select 0, %s4, %s2
  $region1: #{a_call__.1} parent=0
    #allocation2 [shape = 'u8[32768]{0}', space=vmem, size = 0x8000, scoped, tag = 'output window, operand 0, single buffered']
    // Predicated region
    $region2: #{a_call__.1} parent=1 // pred_check
      _
    $region3: #{a_call__.1} parent=1 // pred_check_branch
      %7 = sbr.rel (0) target = $region5
    $region4: #{a_call__.1} parent=1 // pred_region
      _
    $region5: #{a_call__.1} parent=1 // pred_fallthru
      _
    %v8 = vld [vmem:[%s0] sm:$0xff]
    %v9 = vld [vmem:[%s0 + $0x8] sm:$0xff]
    %v10 = vld [vmem:[%s0 + $0x10] sm:$0xff]
    %v11 = vld [vmem:[%s0 + $0x18] sm:$0xff]
    %v12 = vld [vmem:[%s0 + $0x20] sm:$0xff]
    %v13 = vld [vmem:[%s0 + $0x28] sm:$0xff]
    %v14 = vld [vmem:[%s0 + $0x30] sm:$0xff]
    %v15 = vld [vmem:[%s0 + $0x38] sm:$0xff]
    %16 = vst [vmem:[#allocation2] sm:$0xff] %v8
    %17 = vst [vmem:[#allocation2 + $0x8] sm:$0xff] %v9
    %18 = vst [vmem:[#allocation2 + $0x10] sm:$0xff] %v10
    %19 = vst [vmem:[#allocation2 + $0x18] sm:$0xff] %v11
    %20 = vst [vmem:[#allocation2 + $0x20] sm:$0xff] %v12
    %21 = vst [vmem:[#allocation2 + $0x28] sm:$0xff] %v13
    %22 = vst [vmem:[#allocation2 + $0x30] sm:$0xff] %v14
    %23 = vst [vmem:[#allocation2 + $0x38] sm:$0xff] %v15
    // Predicated region
    $region6: #{a_call__.1} parent=1 // pred_check
      _
    $region7: #{a_call__.1} parent=1 // pred_check_branch
      %25 = sbr.rel (0) target = $region9
    $region8: #{a_call__.1} parent=1 // pred_region
      // Predicated region
      $region10: #{a_call__.1} parent=8 // pred_check
        _
      $region11: #{a_call__.1} parent=8 // pred_check_branch
        %27 = sbr.rel (0) target = $region13
      $region12: #{a_call__.1} parent=8 // pred_region
        // Predicated region
        $region14: #{a_call__.1} parent=12 // pred_check
          _
        $region15: #{a_call__.1} parent=12 // pred_check_branch
          %29 = sbr.rel (0) target = $region17
        $region16: #{a_call__.1} parent=12 // pred_region
          loop: start=0, step=1, limit=1
          $region18: #{a_call__.1} parent=16 // loop_pre_header
            _
          $region19: #{a_call__.1} parent=16 // loop_header
            %s31 = sphi 0, %s35
            %p32 = scmp.ge.s32.totalorder %s31, 1
            %s36 = sphi [#allocation2], [#allocation2]
            %s37 = sphi %s1, %s1
          $region20: #{a_call__.1} parent=16 // loop_header_branch
            %34 = sbr.rel (%p32) target = $region24
          $region21: #{a_call__.1} parent=16 // loop_body
            %v38 = vld [vmem:[%s36] sm:$0xff]
            %39 = vst [vmem:[%s37] sm:$0xff] %v38
            %v40 = vld [vmem:[%s36 + $0x8] sm:$0xff]
            %41 = vst [vmem:[%s37 + $0x8] sm:$0xff] %v40
          $region22: #{a_call__.1} parent=16 // loop_footer
            %s35 = sadd.s32 1, %s31
          $region23: #{a_call__.1} parent=16 // loop_footer_branch
            %30 = sbr.rel target = $region19
          $region24: #{a_call__.1} parent=16 // loop_exit
            _
        $region17: #{a_call__.1} parent=12 // pred_fallthru
          _
        // Predicated region
        $region25: #{a_call__.1} parent=12 // pred_check
          _
        $region26: #{a_call__.1} parent=12 // pred_check_branch
          %43 = sbr.rel target = $region28
        $region27: #{a_call__.1} parent=12 // pred_region
          _
        $region28: #{a_call__.1} parent=12 // pred_fallthru
          _
      $region13: #{a_call__.1} parent=8 // pred_fallthru
        _
      %44 = vnop
    $region9: #{a_call__.1} parent=1 // pred_fallthru
      _
    // Predicated region
    $region29: #{a_call__.1} parent=1 // pred_check
      _
    $region30: #{a_call__.1} parent=1 // pred_check_branch
      %46 = sbr.rel (0) target = $region32
    $region31: #{a_call__.1} parent=1 // pred_region
      _
    $region32: #{a_call__.1} parent=1 // pred_fallthru
      _

</llo_original>
